<compile_context>
chip_gen: v7x
topology: tpu7x:2x2x1
jax: 0.10.0
libtpu: 0.0.40
codegen_flags: <defaults>
</compile_context>

<pallas_src>
import functools

import jax
import jax.numpy as jnp
from jax.experimental import pallas as pl
from jax.experimental.pallas import tpu as pltpu

_NEG = -1e30  # effectively -inf, but finite (avoids inf-inf NaNs)


def _scwd_stage_kernel(
    s_ref, t_ref, out_ref,
    acc_ck, max_t, z_t, a_ts, max_s, z_s,
    *, tau, c_gain, pix_gain, m_total, tile_m,
):
    """One M-tile of one stage.

    s_ref, t_ref : (TILE_M, K) input tiles (any float dtype, cast to f32).
    out_ref      : (1, 1) f32 SMEM scalar (written on the last grid step).
    acc_ck       : (1, K) f32 VMEM — channel-KL column accumulator.
    max_t/z_t/a_ts/max_s/z_s : (1, K) f32 VMEM — streaming column stats.
    """
    i = pl.program_id(0)
    last = pl.num_programs(0) - 1
    f32 = jnp.float32

    compute_row = (c_gain != 0)          # static
    compute_col = (pix_gain != 0)        # static
    need_mask = (m_total % tile_m) != 0  # static

    # ---- init persistent accumulators on the first tile ----
    @pl.when(i == 0)
    def _init():
        if compute_row:
            acc_ck[...] = jnp.zeros(acc_ck.shape, f32)
        if compute_col:
            max_t[...] = jnp.full(max_t.shape, _NEG, f32)
            max_s[...] = jnp.full(max_s.shape, _NEG, f32)
            z_t[...] = jnp.zeros(z_t.shape, f32)
            z_s[...] = jnp.zeros(z_s.shape, f32)
            a_ts[...] = jnp.zeros(a_ts.shape, f32)

    t_raw = t_ref[...].astype(f32)
    s_raw = s_ref[...].astype(f32)
    if tau != 1.0:                       # statically skip /tau when tau == 1
        inv_tau = f32(1.0 / tau)
        t_raw = t_raw * inv_tau
        s_raw = s_raw * inv_tau

    if need_mask:
        # Last tile may hang past M; mask padded rows.
        row_ids = jax.lax.broadcasted_iota(jnp.int32, (tile_m, 1), 0) + i * tile_m
        valid = row_ids < m_total
        # rows of zeros contribute exactly 0 to the row-KL (t == s)
        t0 = jnp.where(valid, t_raw, 0.0)
        s0 = jnp.where(valid, s_raw, 0.0)
        # -inf-like rows contribute 0 to the column exp-sums
        t_c = jnp.where(valid, t_raw, _NEG)
        s_c = jnp.where(valid, s_raw, _NEG)
    else:
        t0, s0 = t_raw, s_raw
        t_c, s_c = t_raw, s_raw

    diff = t0 - s0  # shared by both KL directions

    # ---- channel KL (softmax over K = axis 1); rows complete in-tile ----
    if compute_row:
        m_t_r = jnp.max(t0, axis=1, keepdims=True)
        m_s_r = jnp.max(s0, axis=1, keepdims=True)
        e_t_r = jnp.exp(t0 - m_t_r)                      # reused for p_t below
        e_s_r = jnp.exp(s0 - m_s_r)
        zr_t = jnp.sum(e_t_r, axis=1, keepdims=True)
        zr_s = jnp.sum(e_s_r, axis=1, keepdims=True)
        lse_diff = (m_t_r - m_s_r) + (jnp.log(zr_t) - jnp.log(zr_s))
        p_t = e_t_r * (1.0 / zr_t)                       # cheap (TILE_M,1) divide
        contrib = p_t * (diff - lse_diff)                # (TILE_M, K), VPU
        acc_ck[...] += jnp.sum(contrib, axis=0, keepdims=True)   # XLU (has slack)

    # ---- pixel KL (softmax over M = axis 0): streaming column stats ----
    if compute_col:
        run_mt = max_t[...]
        run_ms = max_s[...]
        new_mt = jnp.maximum(run_mt, jnp.max(t_c, axis=0, keepdims=True))
        new_ms = jnp.maximum(run_ms, jnp.max(s_c, axis=0, keepdims=True))
        corr_t = jnp.exp(run_mt - new_mt)
        corr_s = jnp.exp(run_ms - new_ms)
        e_t_c = jnp.exp(t_c - new_mt)
        e_s_c = jnp.exp(s_c - new_ms)
        z_t[...] = z_t[...] * corr_t + jnp.sum(e_t_c, axis=0, keepdims=True)
        z_s[...] = z_s[...] * corr_s + jnp.sum(e_s_c, axis=0, keepdims=True)
        a_ts[...] = a_ts[...] * corr_t + jnp.sum(e_t_c * diff, axis=0, keepdims=True)
        max_t[...] = new_mt
        max_s[...] = new_ms

    # ---- finalize: tiny (1, K) reductions + scalar store on last tile ----
    @pl.when(i == last)
    def _finalize():
        cost = f32(0.0)
        scale = f32(tau * tau)
        if compute_row:
            row_kl = jnp.sum(acc_ck[...])
            if tau != 1.0:
                row_kl = row_kl * scale
            cost = cost + f32(c_gain) * row_kl
        if compute_col:
            # KL_col = sum_k [ E_{p_t}[t - s] - (lse_t[k] - lse_s[k]) ]
            lse_t = max_t[...] + jnp.log(z_t[...])
            lse_s = max_s[...] + jnp.log(z_s[...])
            col_kl = jnp.sum(a_ts[...] / z_t[...] - (lse_t - lse_s))
            if tau != 1.0:
                col_kl = col_kl * scale
            cost = cost + f32(pix_gain) * col_kl
        out_ref[0, 0] = cost


def _pick_tile_m(M, K, override=None):
    """Pick TILE_M: multiple of 8 (or full M), ~1 MiB per f32 input tile."""
    if override is not None:
        tile = min(int(override), M)
        if tile < M:
            assert tile % 8 == 0, "tile_m override must be a multiple of 8"
        return tile
    budget = (1 << 20) // max(4 * K, 1)        # rows per ~1 MiB f32 tile
    budget = max(8, min(1024, (budget // 8) * 8))
    if M <= budget:
        return M                                # full-M block (always legal)
    return budget                               # multiple of 8; last tile masked


def _scwd_stage(s, t, *, tau, c_gain, pix_gain, tile_m_override=None):
    """One stage of SCWDLoss. s, t: (N, C, H, W)."""
    assert s.shape == t.shape
    N, C, H, W = s.shape
    M, K = N * C, H * W

    if c_gain == 0 and pix_gain == 0:
        return jnp.float32(0.0)

    s2 = s.reshape(M, K)
    t2 = t.reshape(M, K)

    tile_m = _pick_tile_m(M, K, tile_m_override)
    grid = (pl.cdiv(M, tile_m),)

    kernel = functools.partial(
        _scwd_stage_kernel,
        tau=tau, c_gain=c_gain, pix_gain=pix_gain, m_total=M, tile_m=tile_m,
    )

    n_terms = (1 if c_gain != 0 else 0) + (1 if pix_gain != 0 else 0)
    cost_est = pl.CostEstimate(
        flops=int(12 * M * K * max(n_terms, 1)),
        transcendentals=int(2 * M * K * n_terms),   # ~2 exps / element / direction
        bytes_accessed=int(M * K * (s2.dtype.itemsize + t2.dtype.itemsize) + 4),
    )

    cost = pl.pallas_call(
        kernel,
        out_shape=jax.ShapeDtypeStruct((1, 1), jnp.float32),
        grid_spec=pltpu.PrefetchScalarGridSpec(
            num_scalar_prefetch=0,
            grid=grid,
            in_specs=[
                pl.BlockSpec((tile_m, K), lambda i: (i, 0)),
                pl.BlockSpec((tile_m, K), lambda i: (i, 0)),
            ],
            out_specs=pl.BlockSpec(
                (1, 1), lambda i: (0, 0),
                memory_space=pltpu.MemorySpace.SMEM,
            ),
            scratch_shapes=[
                pltpu.VMEM((1, K), jnp.float32),       # channel-KL column accumulator
                pltpu.VMEM((1, K), jnp.float32),       # running col max (teacher)
                pltpu.VMEM((1, K), jnp.float32),       # running col sum-exp (teacher)
                pltpu.VMEM((1, K), jnp.float32),       # running col sum exp_t*(t-s)
                pltpu.VMEM((1, K), jnp.float32),       # running col max (student)
                pltpu.VMEM((1, K), jnp.float32),       # running col sum-exp (student)
            ],
        ),
        compiler_params=pltpu.CompilerParams(
            # grid axis carries streaming column stats -> must stay sequential
            dimension_semantics=("arbitrary",),
            vmem_limit_bytes=32 * 1024 * 1024,
        ),
        cost_estimate=cost_est,
    )(s2, t2)[0, 0]

    # Match the PyTorch module's normalization exactly:
    #   if pix_gain == 0: divide by C*N   else: divide by C*N*2
    denom = (C * N) if pix_gain == 0 else (C * N * 2)
    return cost / jnp.float32(denom)


def scwd_loss(y_s, y_t, tau=1.0, c_gain=1.0, pix_gain=0.125, tile_m_override=None):
    """SCWDLoss.forward: y_s, y_t are lists of (N, C, H, W) arrays."""
    assert len(y_s) == len(y_t)
    losses = [
        _scwd_stage(s, t, tau=tau, c_gain=c_gain, pix_gain=pix_gain,
                    tile_m_override=tile_m_override)
        for s, t in zip(y_s, y_t)
    ]
    return sum(losses)


def _scwd_loss_ref(y_s, y_t, tau=1.0, c_gain=1.0, pix_gain=0.125):
    """Pure-JAX reference mirroring the PyTorch forward exactly."""
    total = 0.0
    for s, t in zip(y_s, y_t):
        N, C, H, W = s.shape
        t2 = t.reshape(-1, H * W).astype(jnp.float32)
        s2 = s.reshape(-1, H * W).astype(jnp.float32)
        cost = 0.0
        if c_gain != 0:
            p_t = jax.nn.softmax(t2 / tau, axis=1)
            cost = c_gain * jnp.sum(
                p_t * jax.nn.log_softmax(t2 / tau, axis=1)
                - p_t * jax.nn.log_softmax(s2 / tau, axis=1)
            ) * tau ** 2
        if pix_gain != 0:
            p_t = jax.nn.softmax(t2 / tau, axis=0)
            cost = cost + pix_gain * jnp.sum(
                p_t * jax.nn.log_softmax(t2 / tau, axis=0)
                - p_t * jax.nn.log_softmax(s2 / tau, axis=0)
            ) * tau ** 2
        denom = (C * N) if pix_gain == 0 else (C * N * 2)
        total = total + cost / denom
    return total


if __name__ == "__main__":
    key = jax.random.PRNGKey(0)
    k1, k2, k3, k4, k5, k6 = jax.random.split(key, 6)

    # FPN-like stages of student / teacher feature maps (small shapes).
    y_s = [
        jax.random.normal(k1, (2, 4, 16, 16), dtype=jnp.float32),
        jax.random.normal(k2, (2, 4, 8, 8), dtype=jnp.float32),
        jax.random.normal(k5, (2, 24, 16, 16), dtype=jnp.float32),
    ]
    y_t = [
        jax.random.normal(k3, (2, 4, 16, 16), dtype=jnp.float32),
        jax.random.normal(k4, (2, 4, 8, 8), dtype=jnp.float32),
        jax.random.normal(k6, (2, 24, 16, 16), dtype=jnp.float32),
    ]

    ref = _scwd_loss_ref(y_s, y_t, tau=1.0, c_gain=1.0, pix_gain=0.125)

    # 1) default tiling (each stage fits in one tile at these sizes)
    loss = scwd_loss(y_s, y_t, tau=1.0, c_gain=1.0, pix_gain=0.125)
    loss = jax.block_until_ready(loss)
    assert jnp.allclose(loss, ref, rtol=5e-4, atol=1e-5), (loss, ref)

    # 2) forced small tile: exercises the multi-tile streaming path and the
    #    masked partial last tile (stage 3 has M = 48, tile = 32 -> grid of 2).
    loss_tiled = scwd_loss(y_s, y_t, tau=1.0, c_gain=1.0, pix_gain=0.125,
                           tile_m_override=32)
    loss_tiled = jax.block_until_ready(loss_tiled)
    assert jnp.allclose(loss_tiled, ref, rtol=5e-4, atol=1e-5), (loss_tiled, ref)

    # 3) non-trivial tau and gains on the first stage (exercises the tau**2
    #    scaling path and alternate gain constants).
    ref_tau = _scwd_loss_ref(y_s[:1], y_t[:1], tau=2.0, c_gain=1.5, pix_gain=0.25)
    loss_tau = scwd_loss(y_s[:1], y_t[:1], tau=2.0, c_gain=1.5, pix_gain=0.25)
    loss_tau = jax.block_until_ready(loss_tau)
    assert jnp.allclose(loss_tau, ref_tau, rtol=5e-4, atol=1e-5), (loss_tau, ref_tau)

    print("KERNEL_OK")
</pallas_src>

<mosaic_0001>
module attributes {stable_mosaic.version = 11 : i64} {
  func.func @_scwd_stage_kernel(%arg0: i32, %arg1: memref<8x256xf32, #tpu.memory_space<vmem>>, %arg2: memref<8x256xf32, #tpu.memory_space<vmem>>, %arg3: memref<1x1xf32, #tpu.memory_space<smem>>, %arg4: memref<1x256xf32, #tpu.memory_space<vmem>>, %arg5: memref<1x256xf32, #tpu.memory_space<vmem>>, %arg6: memref<1x256xf32, #tpu.memory_space<vmem>>, %arg7: memref<1x256xf32, #tpu.memory_space<vmem>>, %arg8: memref<1x256xf32, #tpu.memory_space<vmem>>, %arg9: memref<1x256xf32, #tpu.memory_space<vmem>>) attributes {dimension_semantics = [#tpu.dimension_semantics<arbitrary>], iteration_bounds = array<i64: 1>, scalar_prefetch = 0 : i64, scratch_operands = 6 : i64, tpu.core_type = #tpu.core_type<tc>, window_params = [{transform_indices = @transform_0, window_bounds = array<i64: 8, 256>}, {transform_indices = @transform_1, window_bounds = array<i64: 8, 256>}, {transform_indices = @transform_2, window_bounds = array<i64: 1, 1>}]} {
    %c0_i32 = arith.constant 0 : i32
    %0 = arith.cmpi eq, %arg0, %c0_i32 : i32
    %1 = arith.extui %0 : i1 to i32
    %c0_i32_0 = arith.constant 0 : i32
    %2 = arith.cmpi ne, %1, %c0_i32_0 : i32
    scf.if %2 {
      %cst_40 = arith.constant 0.000000e+00 : f32
      %79 = vector.broadcast %cst_40 : f32 to vector<1x256xf32>
      %c0_41 = arith.constant 0 : index
      %c0_42 = arith.constant 0 : index
      %80 = vector.load %arg4[%c0_41, %c0_42] : memref<1x256xf32, #tpu.memory_space<vmem>>, vector<1x256xf32>
      tpu.vector_store %arg4[%c0_41, %c0_42], %79 {strides = array<i32>} : memref<1x256xf32, #tpu.memory_space<vmem>>, vector<1x256xf32>,
      %cst_43 = arith.constant -1.000000e+30 : f32
      %81 = vector.broadcast %cst_43 : f32 to vector<1x256xf32>
      %c0_44 = arith.constant 0 : index
      %c0_45 = arith.constant 0 : index
      %82 = vector.load %arg5[%c0_44, %c0_45] : memref<1x256xf32, #tpu.memory_space<vmem>>, vector<1x256xf32>
      tpu.vector_store %arg5[%c0_44, %c0_45], %81 {strides = array<i32>} : memref<1x256xf32, #tpu.memory_space<vmem>>, vector<1x256xf32>,
      %cst_46 = arith.constant -1.000000e+30 : f32
      %83 = vector.broadcast %cst_46 : f32 to vector<1x256xf32>
      %c0_47 = arith.constant 0 : index
      %c0_48 = arith.constant 0 : index
      %84 = vector.load %arg8[%c0_47, %c0_48] : memref<1x256xf32, #tpu.memory_space<vmem>>, vector<1x256xf32>
      tpu.vector_store %arg8[%c0_47, %c0_48], %83 {strides = array<i32>} : memref<1x256xf32, #tpu.memory_space<vmem>>, vector<1x256xf32>,
      %cst_49 = arith.constant 0.000000e+00 : f32
      %85 = vector.broadcast %cst_49 : f32 to vector<1x256xf32>
      %c0_50 = arith.constant 0 : index
      %c0_51 = arith.constant 0 : index
      %86 = vector.load %arg6[%c0_50, %c0_51] : memref<1x256xf32, #tpu.memory_space<vmem>>, vector<1x256xf32>
      tpu.vector_store %arg6[%c0_50, %c0_51], %85 {strides = array<i32>} : memref<1x256xf32, #tpu.memory_space<vmem>>, vector<1x256xf32>,
      %cst_52 = arith.constant 0.000000e+00 : f32
      %87 = vector.broadcast %cst_52 : f32 to vector<1x256xf32>
      %c0_53 = arith.constant 0 : index
      %c0_54 = arith.constant 0 : index
      %88 = vector.load %arg9[%c0_53, %c0_54] : memref<1x256xf32, #tpu.memory_space<vmem>>, vector<1x256xf32>
      tpu.vector_store %arg9[%c0_53, %c0_54], %87 {strides = array<i32>} : memref<1x256xf32, #tpu.memory_space<vmem>>, vector<1x256xf32>,
      %cst_55 = arith.constant 0.000000e+00 : f32
      %89 = vector.broadcast %cst_55 : f32 to vector<1x256xf32>
      %c0_56 = arith.constant 0 : index
      %c0_57 = arith.constant 0 : index
      %90 = vector.load %arg7[%c0_56, %c0_57] : memref<1x256xf32, #tpu.memory_space<vmem>>, vector<1x256xf32>
      tpu.vector_store %arg7[%c0_56, %c0_57], %89 {strides = array<i32>} : memref<1x256xf32, #tpu.memory_space<vmem>>, vector<1x256xf32>,
    } else {
    }
    %c0 = arith.constant 0 : index
    %c0_1 = arith.constant 0 : index
    %3 = vector.load %arg2[%c0, %c0_1] : memref<8x256xf32, #tpu.memory_space<vmem>>, vector<8x256xf32>
    %c0_2 = arith.constant 0 : index
    %c0_3 = arith.constant 0 : index
    %4 = vector.load %arg1[%c0_2, %c0_3] : memref<8x256xf32, #tpu.memory_space<vmem>>, vector<8x256xf32>
    %5 = arith.subf %3, %4 : vector<8x256xf32>
    %cst = arith.constant dense<0xFF800000> : vector<8xf32>
    %6 = vector.multi_reduction <maximumf>, %3, %cst [1] : vector<8x256xf32> to vector<8xf32>
    %7 = vector.shape_cast %6 : vector<8xf32> to vector<8x1xf32>
    %cst_4 = arith.constant dense<0xFF800000> : vector<8xf32>
    %8 = vector.multi_reduction <maximumf>, %4, %cst_4 [1] : vector<8x256xf32> to vector<8xf32>
    %9 = vector.shape_cast %8 : vector<8xf32> to vector<8x1xf32>
    %10 = vector.broadcast %7 : vector<8x1xf32> to vector<8x256xf32>
    %11 = arith.subf %3, %10 : vector<8x256xf32>
    %12 = math.exp %11 : vector<8x256xf32>
    %13 = vector.broadcast %9 : vector<8x1xf32> to vector<8x256xf32>
    %14 = arith.subf %4, %13 : vector<8x256xf32>
    %15 = math.exp %14 : vector<8x256xf32>
    %cst_5 = arith.constant dense<0.000000e+00> : vector<8xf32>
    %16 = vector.multi_reduction <add>, %12, %cst_5 [1] : vector<8x256xf32> to vector<8xf32>
    %17 = vector.shape_cast %16 : vector<8xf32> to vector<8x1xf32>
    %cst_6 = arith.constant dense<0.000000e+00> : vector<8xf32>
    %18 = vector.multi_reduction <add>, %15, %cst_6 [1] : vector<8x256xf32> to vector<8xf32>
    %19 = vector.shape_cast %18 : vector<8xf32> to vector<8x1xf32>
    %20 = arith.subf %7, %9 : vector<8x1xf32>
    %21 = math.log %17 : vector<8x1xf32>
    %22 = math.log %19 : vector<8x1xf32>
    %23 = arith.subf %21, %22 : vector<8x1xf32>
    %24 = arith.addf %20, %23 : vector<8x1xf32>
    %cst_7 = arith.constant 1.000000e+00 : f32
    %25 = vector.broadcast %cst_7 : f32 to vector<8x1xf32>
    %26 = arith.divf %25, %17 : vector<8x1xf32>
    %27 = vector.broadcast %26 : vector<8x1xf32> to vector<8x256xf32>
    %28 = arith.mulf %12, %27 : vector<8x256xf32>
    %29 = vector.broadcast %24 : vector<8x1xf32> to vector<8x256xf32>
    %30 = arith.subf %5, %29 : vector<8x256xf32>
    %31 = arith.mulf %28, %30 : vector<8x256xf32>
    %c0_8 = arith.constant 0 : index
    %c0_9 = arith.constant 0 : index
    %32 = vector.load %arg4[%c0_8, %c0_9] : memref<1x256xf32, #tpu.memory_space<vmem>>, vector<1x256xf32>
    %cst_10 = arith.constant dense<0.000000e+00> : vector<256xf32>
    %33 = vector.multi_reduction <add>, %31, %cst_10 [0] : vector<8x256xf32> to vector<256xf32>
    %34 = vector.shape_cast %33 : vector<256xf32> to vector<1x256xf32>
    %35 = arith.addf %32, %34 : vector<1x256xf32>
    %c0_11 = arith.constant 0 : index
    %c0_12 = arith.constant 0 : index
    %36 = vector.load %arg4[%c0_11, %c0_12] : memref<1x256xf32, #tpu.memory_space<vmem>>, vector<1x256xf32>
    tpu.vector_store %arg4[%c0_11, %c0_12], %35 {strides = array<i32>} : memref<1x256xf32, #tpu.memory_space<vmem>>, vector<1x256xf32>,
    %c0_13 = arith.constant 0 : index
    %c0_14 = arith.constant 0 : index
    %37 = vector.load %arg5[%c0_13, %c0_14] : memref<1x256xf32, #tpu.memory_space<vmem>>, vector<1x256xf32>
    %c0_15 = arith.constant 0 : index
    %c0_16 = arith.constant 0 : index
    %38 = vector.load %arg8[%c0_15, %c0_16] : memref<1x256xf32, #tpu.memory_space<vmem>>, vector<1x256xf32>
    %cst_17 = arith.constant dense<0xFF800000> : vector<256xf32>
    %39 = vector.multi_reduction <maximumf>, %3, %cst_17 [0] : vector<8x256xf32> to vector<256xf32>
    %40 = vector.shape_cast %39 : vector<256xf32> to vector<1x256xf32>
    %41 = arith.maximumf %37, %40 : vector<1x256xf32>
    %cst_18 = arith.constant dense<0xFF800000> : vector<256xf32>
    %42 = vector.multi_reduction <maximumf>, %4, %cst_18 [0] : vector<8x256xf32> to vector<256xf32>
    %43 = vector.shape_cast %42 : vector<256xf32> to vector<1x256xf32>
    %44 = arith.maximumf %38, %43 : vector<1x256xf32>
    %45 = arith.subf %37, %41 : vector<1x256xf32>
    %46 = math.exp %45 : vector<1x256xf32>
    %47 = arith.subf %38, %44 : vector<1x256xf32>
    %48 = math.exp %47 : vector<1x256xf32>
    %49 = vector.broadcast %41 : vector<1x256xf32> to vector<8x256xf32>
    %50 = arith.subf %3, %49 : vector<8x256xf32>
    %51 = math.exp %50 : vector<8x256xf32>
    %52 = vector.broadcast %44 : vector<1x256xf32> to vector<8x256xf32>
    %53 = arith.subf %4, %52 : vector<8x256xf32>
    %54 = math.exp %53 : vector<8x256xf32>
    %c0_19 = arith.constant 0 : index
    %c0_20 = arith.constant 0 : index
    %55 = vector.load %arg6[%c0_19, %c0_20] : memref<1x256xf32, #tpu.memory_space<vmem>>, vector<1x256xf32>
    %56 = arith.mulf %55, %46 : vector<1x256xf32>
    %cst_21 = arith.constant dense<0.000000e+00> : vector<256xf32>
    %57 = vector.multi_reduction <add>, %51, %cst_21 [0] : vector<8x256xf32> to vector<256xf32>
    %58 = vector.shape_cast %57 : vector<256xf32> to vector<1x256xf32>
    %59 = arith.addf %56, %58 : vector<1x256xf32>
    %c0_22 = arith.constant 0 : index
    %c0_23 = arith.constant 0 : index
    %60 = vector.load %arg6[%c0_22, %c0_23] : memref<1x256xf32, #tpu.memory_space<vmem>>, vector<1x256xf32>
    tpu.vector_store %arg6[%c0_22, %c0_23], %59 {strides = array<i32>} : memref<1x256xf32, #tpu.memory_space<vmem>>, vector<1x256xf32>,
    %c0_24 = arith.constant 0 : index
    %c0_25 = arith.constant 0 : index
    %61 = vector.load %arg9[%c0_24, %c0_25] : memref<1x256xf32, #tpu.memory_space<vmem>>, vector<1x256xf32>
    %62 = arith.mulf %61, %48 : vector<1x256xf32>
    %cst_26 = arith.constant dense<0.000000e+00> : vector<256xf32>
    %63 = vector.multi_reduction <add>, %54, %cst_26 [0] : vector<8x256xf32> to vector<256xf32>
    %64 = vector.shape_cast %63 : vector<256xf32> to vector<1x256xf32>
    %65 = arith.addf %62, %64 : vector<1x256xf32>
    %c0_27 = arith.constant 0 : index
    %c0_28 = arith.constant 0 : index
    %66 = vector.load %arg9[%c0_27, %c0_28] : memref<1x256xf32, #tpu.memory_space<vmem>>, vector<1x256xf32>
    tpu.vector_store %arg9[%c0_27, %c0_28], %65 {strides = array<i32>} : memref<1x256xf32, #tpu.memory_space<vmem>>, vector<1x256xf32>,
    %c0_29 = arith.constant 0 : index
    %c0_30 = arith.constant 0 : index
    %67 = vector.load %arg7[%c0_29, %c0_30] : memref<1x256xf32, #tpu.memory_space<vmem>>, vector<1x256xf32>
    %68 = arith.mulf %67, %46 : vector<1x256xf32>
    %69 = arith.mulf %51, %5 : vector<8x256xf32>
    %cst_31 = arith.constant dense<0.000000e+00> : vector<256xf32>
    %70 = vector.multi_reduction <add>, %69, %cst_31 [0] : vector<8x256xf32> to vector<256xf32>
    %71 = vector.shape_cast %70 : vector<256xf32> to vector<1x256xf32>
    %72 = arith.addf %68, %71 : vector<1x256xf32>
    %c0_32 = arith.constant 0 : index
    %c0_33 = arith.constant 0 : index
    %73 = vector.load %arg7[%c0_32, %c0_33] : memref<1x256xf32, #tpu.memory_space<vmem>>, vector<1x256xf32>
    tpu.vector_store %arg7[%c0_32, %c0_33], %72 {strides = array<i32>} : memref<1x256xf32, #tpu.memory_space<vmem>>, vector<1x256xf32>,
    %c0_34 = arith.constant 0 : index
    %c0_35 = arith.constant 0 : index
    %74 = vector.load %arg5[%c0_34, %c0_35] : memref<1x256xf32, #tpu.memory_space<vmem>>, vector<1x256xf32>
    tpu.vector_store %arg5[%c0_34, %c0_35], %41 {strides = array<i32>} : memref<1x256xf32, #tpu.memory_space<vmem>>, vector<1x256xf32>,
    %c0_36 = arith.constant 0 : index
    %c0_37 = arith.constant 0 : index
    %75 = vector.load %arg8[%c0_36, %c0_37] : memref<1x256xf32, #tpu.memory_space<vmem>>, vector<1x256xf32>
    tpu.vector_store %arg8[%c0_36, %c0_37], %44 {strides = array<i32>} : memref<1x256xf32, #tpu.memory_space<vmem>>, vector<1x256xf32>,
    %c0_i32_38 = arith.constant 0 : i32
    %76 = arith.cmpi eq, %arg0, %c0_i32_38 : i32
    %77 = arith.extui %76 : i1 to i32
    %c0_i32_39 = arith.constant 0 : i32
    %78 = arith.cmpi ne, %77, %c0_i32_39 : i32
    scf.if %78 {
      %c0_40 = arith.constant 0 : index
      %c0_41 = arith.constant 0 : index
      %79 = vector.load %arg4[%c0_40, %c0_41] : memref<1x256xf32, #tpu.memory_space<vmem>>, vector<1x256xf32>
      %80 = vector.shape_cast %79 : vector<1x256xf32> to vector<1x1x256xf32>
      %cst_42 = arith.constant dense<0.000000e+00> : vector<1xf32>
      %81 = vector.multi_reduction <add>, %80, %cst_42 [1, 2] : vector<1x1x256xf32> to vector<1xf32>
      %82 = vector.shape_cast %81 : vector<1xf32> to vector<1x1x1xf32>
      %83 = vector.extract %82[0, 0, 0] : f32 from vector<1x1x1xf32>
      %cst_43 = arith.constant 1.000000e+00 : f32
      %84 = arith.mulf %cst_43, %83 : f32
      %cst_44 = arith.constant 0.000000e+00 : f32
      %85 = arith.addf %cst_44, %84 : f32
      %c0_45 = arith.constant 0 : index
      %c0_46 = arith.constant 0 : index
      %86 = vector.load %arg5[%c0_45, %c0_46] : memref<1x256xf32, #tpu.memory_space<vmem>>, vector<1x256xf32>
      %c0_47 = arith.constant 0 : index
      %c0_48 = arith.constant 0 : index
      %87 = vector.load %arg6[%c0_47, %c0_48] : memref<1x256xf32, #tpu.memory_space<vmem>>, vector<1x256xf32>
      %88 = math.log %87 : vector<1x256xf32>
      %89 = arith.addf %86, %88 : vector<1x256xf32>
      %c0_49 = arith.constant 0 : index
      %c0_50 = arith.constant 0 : index
      %90 = vector.load %arg8[%c0_49, %c0_50] : memref<1x256xf32, #tpu.memory_space<vmem>>, vector<1x256xf32>
      %c0_51 = arith.constant 0 : index
      %c0_52 = arith.constant 0 : index
      %91 = vector.load %arg9[%c0_51, %c0_52] : memref<1x256xf32, #tpu.memory_space<vmem>>, vector<1x256xf32>
      %92 = math.log %91 : vector<1x256xf32>
      %93 = arith.addf %90, %92 : vector<1x256xf32>
      %c0_53 = arith.constant 0 : index
      %c0_54 = arith.constant 0 : index
      %94 = vector.load %arg7[%c0_53, %c0_54] : memref<1x256xf32, #tpu.memory_space<vmem>>, vector<1x256xf32>
      %c0_55 = arith.constant 0 : index
      %c0_56 = arith.constant 0 : index
      %95 = vector.load %arg6[%c0_55, %c0_56] : memref<1x256xf32, #tpu.memory_space<vmem>>, vector<1x256xf32>
      %96 = arith.divf %94, %95 : vector<1x256xf32>
      %97 = arith.subf %89, %93 : vector<1x256xf32>
      %98 = arith.subf %96, %97 : vector<1x256xf32>
      %99 = vector.shape_cast %98 : vector<1x256xf32> to vector<1x1x256xf32>
      %cst_57 = arith.constant dense<0.000000e+00> : vector<1xf32>
      %100 = vector.multi_reduction <add>, %99, %cst_57 [1, 2] : vector<1x1x256xf32> to vector<1xf32>
      %101 = vector.shape_cast %100 : vector<1xf32> to vector<1x1x1xf32>
      %102 = vector.extract %101[0, 0, 0] : f32 from vector<1x1x1xf32>
      %cst_58 = arith.constant 1.250000e-01 : f32
      %103 = arith.mulf %cst_58, %102 : f32
      %104 = arith.addf %85, %103 : f32
      %c0_59 = arith.constant 0 : index
      %c0_60 = arith.constant 0 : index
      %105 = memref.load %arg3[%c0_59, %c0_60] : memref<1x1xf32, #tpu.memory_space<smem>>
      memref.store %104, %arg3[%c0_59, %c0_60] : memref<1x1xf32, #tpu.memory_space<smem>>
    } else {
    }
    return
  }
  func.func @transform_0(%arg0: i32) -> (i32, i32) {
    %c0_i32 = arith.constant 0 : i32
    %c0_i32_0 = arith.constant 0 : i32
    return %arg0, %c0_i32 : i32, i32
  }
  func.func @transform_1(%arg0: i32) -> (i32, i32) {
    %c0_i32 = arith.constant 0 : i32
    %c0_i32_0 = arith.constant 0 : i32
    return %arg0, %c0_i32 : i32, i32
  }
  func.func @transform_2(%arg0: i32) -> (i32, i32) {
    %c0_i32 = arith.constant 0 : i32
    %c0_i32_0 = arith.constant 0 : i32
    %c0_i32_1 = arith.constant 0 : i32
    return %c0_i32, %c0_i32_0 : i32, i32
  }
}

</mosaic_0001>

<llo_original>
// kernel: tpu_custom_call.1
$region0: #{tpu_custom_call.1}
  #allocation0 [shape = 'u32[]', space=smem, size = 0x4, offset = 0x4, fixed_abs, tag = 'smem constant byte address 0x4 - core index']
  #allocation1 [shape = 'u32[144,128]{1,0:T(1,128)}', space=vmem, size = 0x12000, scoped, tag = 'internal scratch']
  #allocation2 [shape = 'f32[1,256]{1,0:T(1,128)}', space=vmem, size = 0x400, scoped, tag = 'scratch operand']
  #allocation3 [shape = 'f32[1,256]{1,0:T(1,128)}', space=vmem, size = 0x400, scoped, tag = 'scratch operand']
  #allocation4 [shape = 'f32[1,256]{1,0:T(1,128)}', space=vmem, size = 0x400, scoped, tag = 'scratch operand']
  #allocation5 [shape = 'f32[1,256]{1,0:T(1,128)}', space=vmem, size = 0x400, scoped, tag = 'scratch operand']
  #allocation6 [shape = 'f32[1,256]{1,0:T(1,128)}', space=vmem, size = 0x400, scoped, tag = 'scratch operand']
  #allocation7 [shape = 'f32[1,256]{1,0:T(1,128)}', space=vmem, size = 0x400, scoped, tag = 'scratch operand']
  %s0 = inlined_call_operand.hbm [shape: f32[8,256], index: 0, kind: input, shape index: {}]
  %s1 = inlined_call_operand.hbm [shape: f32[8,256], index: 1, kind: input, shape index: {}]
  %s2 = inlined_call_operand.hbm [shape: f32[1,1], index: 2, kind: output, shape index: {}]
  %s3 = sld [smem:[#allocation0]]
  $region34: #{tpu_custom_call.1} parent=0
    _
  %s5 = ssub.s32 1, %s3
  %s6 = scalar_select 0, %s5, %s3
  $region1: #{tpu_custom_call.1} parent=0
    #allocation8 [shape = 'u8[8192]{0}', space=vmem, size = 0x2000, scoped, tag = 'input window, operand 0, single buffered']
    #allocation9 [shape = 's32[1]{0}', space=sflag, size = 0x4, scoped, tag = 'scoped memory for tpu_custom_call.1']
    #allocation10 [shape = 's32[1]{0}', space=sflag, size = 0x4, scoped, tag = 'scoped memory for tpu_custom_call.1']
    #allocation11 [shape = 'u8[8192]{0}', space=vmem, size = 0x2000, scoped, tag = 'input window, operand 1, single buffered']
    #allocation12 [shape = 's32[1]{0}', space=sflag, size = 0x4, scoped, tag = 'scoped memory for tpu_custom_call.1']
    #allocation13 [shape = 'u8[512]{0}', space=smem, size = 0x200, scoped, tag = 'output window, operand 0, single buffered']
    %7 = vsyncpa [#allocation9], 0
    %8 = vsyncpa [#allocation12], 0
    %9 = vsyncpa [#allocation10], 0
    // Predicated region
    $region2: #{tpu_custom_call.1} parent=1 // pred_check
      _
    $region3: #{tpu_custom_call.1} parent=1 // pred_check_branch
      %11 = sbr.rel (0) target = $region5
    $region4: #{tpu_custom_call.1} parent=1 // pred_region
      %s13 = ssub.s32 256, 256
      %14 = vsyncadd [#allocation9], %s13
      %s16 = sshll.u32 [#allocation8], 4
      %s17 = int_to_ptr.vmem [resolvable:$true] %s16
      %19 = dma.hbm_to_vmem [thread:$0]  %s0, 256, %s17, [#allocation9]
    $region5: #{tpu_custom_call.1} parent=1 // pred_fallthru
      _
    // Predicated region
    $region6: #{tpu_custom_call.1} parent=1 // pred_check
      _
    $region7: #{tpu_custom_call.1} parent=1 // pred_check_branch
      %21 = sbr.rel (0) target = $region9
    $region8: #{tpu_custom_call.1} parent=1 // pred_region
      %s23 = ssub.s32 256, 256
      %24 = vsyncadd [#allocation12], %s23
      %s26 = sshll.u32 [#allocation11], 4
      %s27 = int_to_ptr.vmem [resolvable:$true] %s26
      %29 = dma.hbm_to_vmem [thread:$0]  %s1, 256, %s27, [#allocation12]
    $region9: #{tpu_custom_call.1} parent=1 // pred_fallthru
      _
    // Predicated region
    $region10: #{tpu_custom_call.1} parent=1 // pred_check
      _
    $region11: #{tpu_custom_call.1} parent=1 // pred_check_branch
      %31 = sbr.rel (0) target = $region13
    $region12: #{tpu_custom_call.1} parent=1 // pred_region
      %32 = dma.done [#allocation9], 256
    $region13: #{tpu_custom_call.1} parent=1 // pred_fallthru
      _
    // Predicated region
    $region14: #{tpu_custom_call.1} parent=1 // pred_check
      _
    $region15: #{tpu_custom_call.1} parent=1 // pred_check_branch
      %34 = sbr.rel (0) target = $region17
    $region16: #{tpu_custom_call.1} parent=1 // pred_region
      %35 = dma.done [#allocation12], 256
    $region17: #{tpu_custom_call.1} parent=1 // pred_fallthru
      _
    %p36 = scmp.eq.s32.totalorder 0, 0
    // Predicated region
    $region18: #{tpu_custom_call.1} parent=1 // pred_check
      %p37 = pneg %p36
    $region19: #{tpu_custom_call.1} parent=1 // pred_check_branch
      %39 = sbr.rel (%p37) target = $region21
    $region20: #{tpu_custom_call.1} parent=1 // pred_region
      %v40 = vlaneseq
      %vm41 = vcmp.ge.s32.totalorder %v40, 0
      %vm42 = vcmp.lt.s32.totalorder %v40, 256
      %vm43 = vmand %vm41, %vm42
      %44 = vst.msk [vmem:[#allocation2] sm:$0x3] %vm43, 0.0
      %45 = vst.msk [vmem:[#allocation3] sm:$0x3] %vm43, -1e+30
      %46 = vst.msk [vmem:[#allocation6] sm:$0x3] %vm43, -1e+30
      %47 = vst.msk [vmem:[#allocation4] sm:$0x3] %vm43, 0.0
      %48 = vst.msk [vmem:[#allocation7] sm:$0x3] %vm43, 0.0
      %49 = vst.msk [vmem:[#allocation5] sm:$0x3] %vm43, 0.0
    $region21: #{tpu_custom_call.1} parent=1 // pred_fallthru
      _
    %v50 = vld [vmem:[#allocation11] sm:$0xff]
    %v51 = vld [vmem:[#allocation11 + $0x8] sm:$0xff]
    %v52 = vld [vmem:[#allocation8] sm:$0xff]
    %v53 = vld [vmem:[#allocation8 + $0x8] sm:$0xff]
    %v54 = vsub.f32 %v50, %v52
    %v55 = vsub.f32 %v51, %v53
    %v56 = vmax.f32 %v50, %v51
    %57 = vmax.xlane.f32.xlu0 %v56
    %v58 = vpop.xlane.xlu0 %57
    %v59 = vmax.f32 %v52, %v53
    %60 = vmax.xlane.f32.xlu0 %v59
    %v61 = vpop.xlane.xlu0 %60
    %v62 = vsub.f32 %v50, %v58
    %v63 = vsub.f32 %v51, %v58
    %v64 = vmul.f32 %v62, 1.442695
    %v65 = vpow.pop %v64
    %v66 = vmul.f32 %v63, 1.442695
    %v67 = vpow.pop %v66
    %v68 = vsub.f32 %v52, %v61
    %v69 = vsub.f32 %v53, %v61
    %v70 = vmul.f32 %v68, 1.442695
    %v71 = vpow.pop %v70
    %v72 = vmul.f32 %v69, 1.442695
    %v73 = vpow.pop %v72
    %v74 = vadd.f32 %v65, %v67
    %75 = vadd.xlane.f32.xlu0 %v74
    %v76 = vpop.xlane.xlu0 %75
    %v77 = vadd.f32 %v71, %v73
    %78 = vadd.xlane.f32.xlu0 %v77
    %v79 = vpop.xlane.xlu0 %78
    %v80 = vsub.f32 %v58, %v61
    %v81 = vlog2.pop %v76
    %v82 = vmul.f32 %v81, 0.6931472
    %v83 = vlog2.pop %v79
    %v84 = vmul.f32 %v83, 0.6931472
    %v85 = vsub.f32 %v82, %v84
    %v86 = vadd.f32 %v80, %v85
    %v87 = vrcp.pop %v76
    %v88 = vmul.f32 1.0, %v87
    %v89 = vmul.f32 %v65, %v88
    %v90 = vmul.f32 %v67, %v88
    %v91 = vsub.f32 %v54, %v86
    %v92 = vsub.f32 %v55, %v86
    %v93 = vmul.f32 %v89, %v91
    %v94 = vmul.f32 %v90, %v92
    %v95 = vld [vmem:[#allocation2] sm:$0x3]
    %v96 = vrot.slane %v93, 4
    %v97 = vadd.f32 %v93, %v96
    %v98 = vrot.slane %v97, 2
    %v99 = vadd.f32 %v97, %v98
    %v100 = vrot.slane %v99, 1
    %v101 = vadd.f32 %v99, %v100
    %v102 = vrot.slane %v94, 4
    %v103 = vadd.f32 %v94, %v102
    %v104 = vrot.slane %v103, 2
    %v105 = vadd.f32 %v103, %v104
    %v106 = vrot.slane %v105, 1
    %v107 = vadd.f32 %v105, %v106
    %v110 = vcombine.low %v101, %v107
    %v112 = vunpack.c.l.s4 1966171168
    %v113 = vunpack.c.0.s8 %v112
    %v114 = vlaneseq
    %v115 = vshrl.u32 %v114, 7
    %v116 = vsub.s32 %v113, %v115
    %v117 = vrot.slane %v110, %v116
    %v119 = vunpack.c.l.s4 1966171168
    %v120 = vunpack.c.0.s8 %v119
    %v121 = vlaneseq
    %v122 = vshrl.u32 %v121, 7
    %v123 = vsub.s32 %v120, %v122
    %v124 = vrot.slane %v117, %v123
    %v126 = vadd.f32 %v95, %v124
    %v127 = vlaneseq
    %vm128 = vcmp.ge.s32.totalorder %v127, 0
    %vm129 = vcmp.lt.s32.totalorder %v127, 256
    %vm130 = vmand %vm128, %vm129
    %131 = vst.msk [vmem:[#allocation2] sm:$0x3] %vm130, %v126
    %v132 = vld [vmem:[#allocation3] sm:$0x3]
    %v133 = vld [vmem:[#allocation6] sm:$0x3]
    %v134 = vrot.slane %v50, 4
    %v135 = vmax.f32 %v50, %v134
    %v136 = vrot.slane %v135, 2
    %v137 = vmax.f32 %v135, %v136
    %v138 = vrot.slane %v137, 1
    %v139 = vmax.f32 %v137, %v138
    %v140 = vrot.slane %v51, 4
    %v141 = vmax.f32 %v51, %v140
    %v142 = vrot.slane %v141, 2
    %v143 = vmax.f32 %v141, %v142
    %v144 = vrot.slane %v143, 1
    %v145 = vmax.f32 %v143, %v144
    %v148 = vcombine.low %v139, %v145
    %v150 = vunpack.c.l.s4 1966171168
    %v151 = vunpack.c.0.s8 %v150
    %v152 = vlaneseq
    %v153 = vshrl.u32 %v152, 7
    %v154 = vsub.s32 %v151, %v153
    %v155 = vrot.slane %v148, %v154
    %v157 = vunpack.c.l.s4 1966171168
    %v158 = vunpack.c.0.s8 %v157
    %v159 = vlaneseq
    %v160 = vshrl.u32 %v159, 7
    %v161 = vsub.s32 %v158, %v160
    %v162 = vrot.slane %v155, %v161
    %v164 = vmax.f32 %v132, %v162
    %v165 = vrot.slane %v52, 4
    %v166 = vmax.f32 %v52, %v165
    %v167 = vrot.slane %v166, 2
    %v168 = vmax.f32 %v166, %v167
    %v169 = vrot.slane %v168, 1
    %v170 = vmax.f32 %v168, %v169
    %v171 = vrot.slane %v53, 4
    %v172 = vmax.f32 %v53, %v171
    %v173 = vrot.slane %v172, 2
    %v174 = vmax.f32 %v172, %v173
    %v175 = vrot.slane %v174, 1
    %v176 = vmax.f32 %v174, %v175
    %v179 = vcombine.low %v170, %v176
    %v181 = vunpack.c.l.s4 1966171168
    %v182 = vunpack.c.0.s8 %v181
    %v183 = vlaneseq
    %v184 = vshrl.u32 %v183, 7
    %v185 = vsub.s32 %v182, %v184
    %v186 = vrot.slane %v179, %v185
    %v188 = vunpack.c.l.s4 1966171168
    %v189 = vunpack.c.0.s8 %v188
    %v190 = vlaneseq
    %v191 = vshrl.u32 %v190, 7
    %v192 = vsub.s32 %v189, %v191
    %v193 = vrot.slane %v186, %v192
    %v195 = vmax.f32 %v133, %v193
    %v196 = vsub.f32 %v132, %v164
    %v197 = vmul.f32 %v196, 1.442695
    %v198 = vpow.pop %v197
    %v199 = vsub.f32 %v133, %v195
    %v200 = vmul.f32 %v199, 1.442695
    %v201 = vpow.pop %v200
    %v203 = vlaneseq
    %v204 = vshrl.u32 %v203, 7
    %v205 = vsub.s32 0, %v204
    %v206 = vrot.slane %v164, %v205
    %v207 = vlaneseq
    %v208 = vshrl.u32 %v207, 7
    %v209 = vsub.s32 1, %v208
    %v210 = vrot.slane %v164, %v209
    %v213 = vsub.f32 %v50, %v206
    %v214 = vsub.f32 %v51, %v210
    %v215 = vmul.f32 %v213, 1.442695
    %v216 = vpow.pop %v215
    %v217 = vmul.f32 %v214, 1.442695
    %v218 = vpow.pop %v217
    %v220 = vlaneseq
    %v221 = vshrl.u32 %v220, 7
    %v222 = vsub.s32 0, %v221
    %v223 = vrot.slane %v195, %v222
    %v224 = vlaneseq
    %v225 = vshrl.u32 %v224, 7
    %v226 = vsub.s32 1, %v225
    %v227 = vrot.slane %v195, %v226
    %v230 = vsub.f32 %v52, %v223
    %v231 = vsub.f32 %v53, %v227
    %v232 = vmul.f32 %v230, 1.442695
    %v233 = vpow.pop %v232
    %v234 = vmul.f32 %v231, 1.442695
    %v235 = vpow.pop %v234
    %v236 = vld [vmem:[#allocation4] sm:$0x3]
    %v237 = vmul.f32 %v236, %v198
    %v238 = vrot.slane %v216, 4
    %v239 = vadd.f32 %v216, %v238
    %v240 = vrot.slane %v239, 2
    %v241 = vadd.f32 %v239, %v240
    %v242 = vrot.slane %v241, 1
    %v243 = vadd.f32 %v241, %v242
    %v244 = vrot.slane %v218, 4
    %v245 = vadd.f32 %v218, %v244
    %v246 = vrot.slane %v245, 2
    %v247 = vadd.f32 %v245, %v246
    %v248 = vrot.slane %v247, 1
    %v249 = vadd.f32 %v247, %v248
    %v252 = vcombine.low %v243, %v249
    %v254 = vunpack.c.l.s4 1966171168
    %v255 = vunpack.c.0.s8 %v254
    %v256 = vlaneseq
    %v257 = vshrl.u32 %v256, 7
    %v258 = vsub.s32 %v255, %v257
    %v259 = vrot.slane %v252, %v258
    %v261 = vunpack.c.l.s4 1966171168
    %v262 = vunpack.c.0.s8 %v261
    %v263 = vlaneseq
    %v264 = vshrl.u32 %v263, 7
    %v265 = vsub.s32 %v262, %v264
    %v266 = vrot.slane %v259, %v265
    %v268 = vadd.f32 %v237, %v266
    %269 = vst.msk [vmem:[#allocation4] sm:$0x3] %vm130, %v268
    %v270 = vld [vmem:[#allocation7] sm:$0x3]
    %v271 = vmul.f32 %v270, %v201
    %v272 = vrot.slane %v233, 4
    %v273 = vadd.f32 %v233, %v272
    %v274 = vrot.slane %v273, 2
    %v275 = vadd.f32 %v273, %v274
    %v276 = vrot.slane %v275, 1
    %v277 = vadd.f32 %v275, %v276
    %v278 = vrot.slane %v235, 4
    %v279 = vadd.f32 %v235, %v278
    %v280 = vrot.slane %v279, 2
    %v281 = vadd.f32 %v279, %v280
    %v282 = vrot.slane %v281, 1
    %v283 = vadd.f32 %v281, %v282
    %v286 = vcombine.low %v277, %v283
    %v288 = vunpack.c.l.s4 1966171168
    %v289 = vunpack.c.0.s8 %v288
    %v290 = vlaneseq
    %v291 = vshrl.u32 %v290, 7
    %v292 = vsub.s32 %v289, %v291
    %v293 = vrot.slane %v286, %v292
    %v295 = vunpack.c.l.s4 1966171168
    %v296 = vunpack.c.0.s8 %v295
    %v297 = vlaneseq
    %v298 = vshrl.u32 %v297, 7
    %v299 = vsub.s32 %v296, %v298
    %v300 = vrot.slane %v293, %v299
    %v302 = vadd.f32 %v271, %v300
    %303 = vst.msk [vmem:[#allocation7] sm:$0x3] %vm130, %v302
    %v304 = vld [vmem:[#allocation5] sm:$0x3]
    %v305 = vmul.f32 %v304, %v198
    %v306 = vmul.f32 %v216, %v54
    %v307 = vmul.f32 %v218, %v55
    %v308 = vrot.slane %v306, 4
    %v309 = vadd.f32 %v306, %v308
    %v310 = vrot.slane %v309, 2
    %v311 = vadd.f32 %v309, %v310
    %v312 = vrot.slane %v311, 1
    %v313 = vadd.f32 %v311, %v312
    %v314 = vrot.slane %v307, 4
    %v315 = vadd.f32 %v307, %v314
    %v316 = vrot.slane %v315, 2
    %v317 = vadd.f32 %v315, %v316
    %v318 = vrot.slane %v317, 1
    %v319 = vadd.f32 %v317, %v318
    %v322 = vcombine.low %v313, %v319
    %v324 = vunpack.c.l.s4 1966171168
    %v325 = vunpack.c.0.s8 %v324
    %v326 = vlaneseq
    %v327 = vshrl.u32 %v326, 7
    %v328 = vsub.s32 %v325, %v327
    %v329 = vrot.slane %v322, %v328
    %v331 = vunpack.c.l.s4 1966171168
    %v332 = vunpack.c.0.s8 %v331
    %v333 = vlaneseq
    %v334 = vshrl.u32 %v333, 7
    %v335 = vsub.s32 %v332, %v334
    %v336 = vrot.slane %v329, %v335
    %v338 = vadd.f32 %v305, %v336
    %339 = vst.msk [vmem:[#allocation5] sm:$0x3] %vm130, %v338
    %340 = vst.msk [vmem:[#allocation3] sm:$0x3] %vm130, %v164
    %341 = vst.msk [vmem:[#allocation6] sm:$0x3] %vm130, %v195
    // Predicated region
    $region22: #{tpu_custom_call.1} parent=1 // pred_check
      %p342 = pneg %p36
    $region23: #{tpu_custom_call.1} parent=1 // pred_check_branch
      %344 = sbr.rel (%p342) target = $region25
    $region24: #{tpu_custom_call.1} parent=1 // pred_region
      %v345 = vld [vmem:[#allocation2] sm:$0x3]
      %v347 = vlaneseq
      %v348 = vshrl.u32 %v347, 7
      %v349 = vsub.s32 0, %v348
      %v350 = vrot.slane %v345, %v349
      %v351 = vlaneseq
      %v352 = vshrl.u32 %v351, 7
      %v353 = vsub.s32 1, %v352
      %v354 = vrot.slane %v345, %v353
      %vm357 = vcmask 1040384
      %v358 = vsel %vm357, %v350, 0.0
      %v359 = vsel %vm357, %v354, 0.0
      %v360 = vadd.f32 %v358, %v359
      %361 = vadd.xlane.f32.xlu0 %v360
      %v362 = vpop.xlane.xlu0 %361
      %v363 = vrot.slane %v362, 4
      %v364 = vadd.f32 %v362, %v363
      %v365 = vrot.slane %v364, 2
      %v366 = vadd.f32 %v364, %v365
      %v367 = vrot.slane %v366, 1
      %v368 = vadd.f32 %v366, %v367
      %s369 = vtos %v368
      %s370 = sadd.f32 %s369, 0.0
      %v371 = vld [vmem:[#allocation3] sm:$0x3]
      %v372 = vld [vmem:[#allocation4] sm:$0x3]
      %v373 = vlog2.pop %v372
      %v374 = vmul.f32 %v373, 0.6931472
      %v375 = vadd.f32 %v371, %v374
      %v376 = vld [vmem:[#allocation6] sm:$0x3]
      %v377 = vld [vmem:[#allocation7] sm:$0x3]
      %v378 = vlog2.pop %v377
      %v379 = vmul.f32 %v378, 0.6931472
      %v380 = vadd.f32 %v376, %v379
      %v381 = vld [vmem:[#allocation5] sm:$0x3]
      %v382 = vrcp.pop %v372
      %v383 = vmul.f32 %v381, %v382
      %v384 = vsub.f32 %v375, %v380
      %v385 = vsub.f32 %v383, %v384
      %v387 = vlaneseq
      %v388 = vshrl.u32 %v387, 7
      %v389 = vsub.s32 0, %v388
      %v390 = vrot.slane %v385, %v389
      %v391 = vlaneseq
      %v392 = vshrl.u32 %v391, 7
      %v393 = vsub.s32 1, %v392
      %v394 = vrot.slane %v385, %v393
      %v397 = vsel %vm357, %v390, 0.0
      %v398 = vsel %vm357, %v394, 0.0
      %v399 = vadd.f32 %v397, %v398
      %400 = vadd.xlane.f32.xlu0 %v399
      %v401 = vpop.xlane.xlu0 %400
      %v402 = vrot.slane %v401, 4
      %v403 = vadd.f32 %v401, %v402
      %v404 = vrot.slane %v403, 2
      %v405 = vadd.f32 %v403, %v404
      %v406 = vrot.slane %v405, 1
      %v407 = vadd.f32 %v405, %v406
      %s408 = vtos %v407
      %s409 = smul.f32 %s408, 0.125
      %s410 = sadd.f32 %s370, %s409
      %s411 = scalar_lea.smem [#allocation13], 0
      %412 = sst [smem:[%s411]] %s410
    $region25: #{tpu_custom_call.1} parent=1 // pred_fallthru
      _
    // Predicated region
    $region26: #{tpu_custom_call.1} parent=1 // pred_check
      _
    $region27: #{tpu_custom_call.1} parent=1 // pred_check_branch
      %414 = sbr.rel (0) target = $region29
    $region28: #{tpu_custom_call.1} parent=1 // pred_region
      %s416 = ssub.s32 16, 16
      %417 = vsyncadd [#allocation10], %s416
      %420 = dma.smem_to_hbm [#allocation13], 16, %s2, [#allocation10]
    $region29: #{tpu_custom_call.1} parent=1 // pred_fallthru
      _
    // Predicated region
    $region30: #{tpu_custom_call.1} parent=1 // pred_check
      _
    $region31: #{tpu_custom_call.1} parent=1 // pred_check_branch
      %422 = sbr.rel (0) target = $region33
    $region32: #{tpu_custom_call.1} parent=1 // pred_region
      %423 = dma.done [#allocation10], 16
    $region33: #{tpu_custom_call.1} parent=1 // pred_fallthru
      _
    %424 = sfence
    %425 = vsyncpa [#allocation9], 1
    %426 = vsyncpa [#allocation12], 1
    %427 = vsyncpa [#allocation10], 1

</llo_original>
